<compile_context>
chip_gen: v7x
topology: tpu7x:2x2x1
jax: 0.10.0
libtpu: 0.0.40
codegen_flags: <defaults>
</compile_context>

<pallas_src>
import jax
import jax.numpy as jnp
from jax.experimental import pallas as pl
from jax.experimental.pallas import tpu as pltpu

_SUBLANE = 8  # f32 sublane granularity


def _round_up(x: int, m: int) -> int:
    return ((x + m - 1) // m) * m


def _vdn_sum_kernel(q_ref, o_ref):
    # q_ref: (tile_b, A) block — batch rows on sublanes, tiny agent axis on lanes.
    # o_ref: (tile_b, 1)
    q = q_ref[...].astype(jnp.float32)          # f32 accumulate (v5e-safe)
    o_ref[...] = jnp.sum(q, axis=1, keepdims=True).astype(o_ref.dtype)


def vdn_mixer_forward(obs, qin_t, *, target_tile_b: int = 16 * 1024):
    """Pallas equivalent of VDNMixer.forward(obs, Qin_t) = Qin_t.sum(1).

    obs   : unused (kept for API fidelity with the PyTorch module)
    qin_t : [B, A] per-agent Q values
    returns [B]
    """
    del obs  # forward() ignores obs
    B, A = qin_t.shape

    # --- tile selection -----------------------------------------------------
    # Tile rows must be a multiple of 8 (sublane constraint) unless the block
    # spans the full batch extent.  For "large" problems force >= 2 roughly
    # balanced grid steps so the "parallel" axis shards across v7x's two TCs.
    target = max(_SUBLANE, (int(target_tile_b) // _SUBLANE) * _SUBLANE)
    if B <= target and B <= 4096:
        tile_b = B                                        # single full-extent block
    else:
        tile_b = min(target, _round_up(pl.cdiv(B, 2), _SUBLANE))
    grid = (pl.cdiv(B, tile_b),)                          # ragged last block is fine

    nbytes = jnp.dtype(qin_t.dtype).itemsize
    cost = pl.CostEstimate(
        flops=B * A,
        transcendentals=0,
        bytes_accessed=(A + 1) * B * nbytes,
    )

    out = pl.pallas_call(
        _vdn_sum_kernel,
        out_shape=jax.ShapeDtypeStruct((B, 1), qin_t.dtype),
        grid=grid,
        in_specs=[pl.BlockSpec((tile_b, A), lambda i: (i, 0))],
        out_specs=pl.BlockSpec((tile_b, 1), lambda i: (i, 0)),
        compiler_params=pltpu.CompilerParams(
            dimension_semantics=("parallel",),
            vmem_limit_bytes=48 * 1024 * 1024,
        ),
        cost_estimate=cost,
    )(qin_t)

    return out[:, 0]


if __name__ == "__main__":
    key = jax.random.PRNGKey(0)
    k_obs, k_q, k_q2 = jax.random.split(key, 3)

    batch = 8
    n_agents = 4
    obs_dim = 16

    # obs is unused by forward(); constructed only for signature fidelity.
    obs = jax.random.normal(k_obs, (batch, n_agents, obs_dim), dtype=jnp.float32)
    qin_t = jax.random.normal(k_q, (batch, n_agents), dtype=jnp.float32)

    # TODO(synk): AgentNet / get_Q_values / get_Q_max / act are inference-time
    # helpers with dynamic Python control flow (and the Adam optimizer in
    # __init__); they are not part of forward() and are not translated.

    out = vdn_mixer_forward(obs, qin_t)
    out = jax.block_until_ready(out)
    ref = jnp.sum(qin_t, axis=1)
    assert out.shape == (batch,)
    assert jnp.allclose(out, ref, atol=1e-6), (out, ref)

    # Second check: multi-step grid with a ragged (partial) last block.
    big_b = 4133
    qin_big = jax.random.normal(k_q2, (big_b, n_agents), dtype=jnp.float32)
    ref_big = jnp.sum(qin_big, axis=1)

    out_big = vdn_mixer_forward(None, qin_big)  # default tile -> 2 balanced steps
    out_big = jax.block_until_ready(out_big)
    assert out_big.shape == (big_b,)
    assert jnp.allclose(out_big, ref_big, atol=1e-5), "large-batch mismatch"

    out_small_tile = vdn_mixer_forward(None, qin_big, target_tile_b=1024)
    out_small_tile = jax.block_until_ready(out_small_tile)
    assert jnp.allclose(out_small_tile, ref_big, atol=1e-5), "small-tile mismatch"

    print("KERNEL_OK")
</pallas_src>

<mosaic_0001>
module attributes {stable_mosaic.version = 11 : i64} {
  func.func @_vdn_sum_kernel(%arg0: i32, %arg1: memref<8x4xf32, #tpu.memory_space<vmem>>, %arg2: memref<8x1xf32, #tpu.memory_space<vmem>>) attributes {dimension_semantics = [#tpu.dimension_semantics<parallel>], iteration_bounds = array<i64: 1>, scalar_prefetch = 0 : i64, scratch_operands = 0 : i64, tpu.core_type = #tpu.core_type<tc>, window_params = [{transform_indices = @transform_0, window_bounds = array<i64: 8, 4>}, {transform_indices = @transform_1, window_bounds = array<i64: 8, 1>}]} {
    %c0 = arith.constant 0 : index
    %c0_0 = arith.constant 0 : index
    %0 = vector.load %arg1[%c0, %c0_0] : memref<8x4xf32, #tpu.memory_space<vmem>>, vector<8x4xf32>
    %cst = arith.constant dense<0.000000e+00> : vector<8xf32>
    %1 = vector.multi_reduction <add>, %0, %cst [1] : vector<8x4xf32> to vector<8xf32>
    %2 = vector.shape_cast %1 : vector<8xf32> to vector<8x1xf32>
    %c0_1 = arith.constant 0 : index
    %c0_2 = arith.constant 0 : index
    %3 = vector.load %arg2[%c0_1, %c0_2] : memref<8x1xf32, #tpu.memory_space<vmem>>, vector<8x1xf32>
    tpu.vector_store %arg2[%c0_1, %c0_2], %2 {strides = array<i32>} : memref<8x1xf32, #tpu.memory_space<vmem>>, vector<8x1xf32>,
    return
  }
  func.func @transform_0(%arg0: i32) -> (i32, i32) {
    %c0_i32 = arith.constant 0 : i32
    %c0_i32_0 = arith.constant 0 : i32
    return %arg0, %c0_i32 : i32, i32
  }
  func.func @transform_1(%arg0: i32) -> (i32, i32) {
    %c0_i32 = arith.constant 0 : i32
    %c0_i32_0 = arith.constant 0 : i32
    return %arg0, %c0_i32 : i32, i32
  }
}

</mosaic_0001>

<llo_original>
// kernel: tpu_custom_call.1
$region0: #{tpu_custom_call.1}
  #allocation0 [shape = 'u32[]', space=smem, size = 0x4, offset = 0x4, fixed_abs, tag = 'smem constant byte address 0x4 - core index']
  #allocation1 [shape = 'u32[144,128]{1,0:T(1,128)}', space=vmem, size = 0x12000, scoped, tag = 'internal scratch']
  %s0 = inlined_call_operand.vmem [shape: f32[8,4], index: 0, kind: input, shape index: {}]
  %s1 = inlined_call_operand.vmem [shape: f32[8,1], index: 1, kind: output, shape index: {}]
  %s2 = sld [smem:[#allocation0]]
  $region14: #{tpu_custom_call.1} parent=0
    _
  %s4 = ssub.s32 1, %s2
  %s5 = scalar_select 0, %s4, %s2
  // Predicated region
  $region2: #{tpu_custom_call.1} parent=0 // pred_check
    _
  $region3: #{tpu_custom_call.1} parent=0 // pred_check_branch
    %7 = sbr.rel (0) target = $region5
  $region4: #{tpu_custom_call.1} parent=0 // pred_region
    _
  $region5: #{tpu_custom_call.1} parent=0 // pred_fallthru
    _
  %v8 = vld [vmem:[%s0] sm:$0xff]
  %vm9 = vcmask 31744
  %v10 = vsel %vm9, %v8, 0.0
  %11 = vadd.xlane.f32.xlu0 %v10
  %v12 = vpop.xlane.xlu0 %11
  %vm13 = vcmask 7168
  %14 = vst.msk [vmem:[%s1] sm:$0xff] %vm13, %v12
  // Predicated region
  $region6: #{tpu_custom_call.1} parent=0 // pred_check
    _
  $region7: #{tpu_custom_call.1} parent=0 // pred_check_branch
    %16 = sbr.rel (0) target = $region9
  $region8: #{tpu_custom_call.1} parent=0 // pred_region
    _
  $region9: #{tpu_custom_call.1} parent=0 // pred_fallthru
    _
  // Predicated region
  $region10: #{tpu_custom_call.1} parent=0 // pred_check
    _
  $region11: #{tpu_custom_call.1} parent=0 // pred_check_branch
    %18 = sbr.rel (0) target = $region13
  $region12: #{tpu_custom_call.1} parent=0 // pred_region
    _
  $region13: #{tpu_custom_call.1} parent=0 // pred_fallthru
    _

</llo_original>
